<compile_context>
chip_gen: v7x
topology: tpu7x:2x2x1
jax: 0.10.0
libtpu: 0.0.40
codegen_flags: <defaults>
</compile_context>

<pallas_src>
import functools

import jax
import jax.numpy as jnp
import numpy as np
from jax.experimental import pallas as pl
from jax.experimental.pallas import tpu as pltpu


def _convblock_kernel(x_ref, w_ref, shift_ref, o_ref, patches_ref, *,
                      dilation, wp, n_cols, c_in, k_rows, b_tile):
    """One grid step == one group of `b_tile` batch elements.

    x_ref:       (B_tile, Cin, Hp*Wp + 2*dil)  bf16, lane-dense padded input
    w_ref:       (Cout, Kpad)                  bf16, (kh,kw,ci) rows, BN scale folded in
    shift_ref:   (Cout, 1)                     f32,  bias / folded BN shift
    o_ref:       (B_tile, Cout, Hout*Wp)       f32,  lane-dense output (Wout cropped in wrapper)
    patches_ref: (Kpad, Hout*Wp)               bf16, VMEM scratch (persists across grid steps)
    """
    k_pad = patches_ref.shape[0]

    # Zero the K-padding rows once.  The matching weight columns are zero too;
    # this only keeps uninitialised VMEM (possible NaNs) out of the 0*x terms.
    if k_pad > k_rows:
        @pl.when(pl.program_id(0) == 0)
        def _():
            patches_ref[k_rows:, :] = jnp.zeros((k_pad - k_rows, n_cols),
                                                patches_ref.dtype)

    w_mat = w_ref[...]        # (Cout, Kpad) bf16 — hoisted out of the b-loop
    shift = shift_ref[...]    # (Cout, 1)    f32

    for b in range(b_tile):   # unrolled; b_tile is small
        # im2col: each tap is a static lane-offset slice of the lane-dense
        # flattened row (single lane realignment, no sublane->lane relayout).
        for kh in range(3):
            for kw in range(3):
                t = kh * 3 + kw
                off = (kh * wp + kw) * dilation
                patches_ref[t * c_in:(t + 1) * c_in, :] = (
                    x_ref[b, :, off:off + n_cols])

        # One fused MXU matmul per element: (Cout, Kpad) @ (Kpad, Hout*Wp),
        # f32 accumulation.
        acc = jnp.dot(w_mat, patches_ref[...],
                      preferred_element_type=jnp.float32)

        # Epilogue: shift (bias / folded eval-mode BN) + ReLU, in f32.
        o_ref[b] = jnp.maximum(acc + shift, 0.0).astype(o_ref.dtype)


def _pick_batch_tile(n, max_tile=8):
    # Largest divisor of n that is <= max_tile (amortises per-grid-step cost).
    # For large n on v7x, cap so the grid length stays >= ~8 (both TCs busy).
    for bt in range(min(n, max_tile), 0, -1):
        if n % bt == 0:
            return bt
    return 1


def convblock_forward(x_nchw, weight_oihw, bias, *, padding, dilation,
                      bn_params=None, eps=1e-5, batch_tile=None):
    """Forward of Convblock.

    x_nchw:      (N, Cin, H, W) float32   (PyTorch NCHW, kept natively)
    weight_oihw: (Cout, Cin, 3, 3) float32 (PyTorch Conv2d layout)
    bias:        (Cout,) float32
    bn_params:   None, or dict(gamma, beta, running_mean, running_var), each (Cout,).
    Returns (N, Cout, Hout, Wout) float32.
    """
    n, c_in, h, w = x_nchw.shape
    c_out = weight_oihw.shape[0]
    h_out = h + 2 * padding - 2 * dilation
    w_out = w + 2 * padding - 2 * dilation
    assert h_out > 0 and w_out > 0
    hp, wp = h + 2 * padding, w + 2 * padding
    l_base = hp * wp
    extra = 2 * dilation              # zero tail so the last tap's slice stays in-bounds
    l_ext = l_base + extra
    n_cols = h_out * wp               # kernel computes the full padded width, crops later

    if batch_tile is None:
        batch_tile = _pick_batch_tile(n)
    assert n % batch_tile == 0
    grid_len = n // batch_tile

    # ---- Input: spatial zero-pad, flatten spatial onto the lane axis,
    #      append the zero tail, cast to bf16 (halves HBM read bytes).
    if padding > 0:
        x_pad = jnp.pad(x_nchw, ((0, 0), (0, 0),
                                 (padding, padding), (padding, padding)))
    else:
        x_pad = x_nchw
    x_flat = x_pad.reshape(n, c_in, l_base)
    x_flat = jnp.pad(x_flat, ((0, 0), (0, 0), (0, extra))).astype(jnp.bfloat16)

    # ---- Per-channel scale/shift from bias + (eval-mode) BatchNorm.
    if bn_params is None:
        scale = jnp.ones((c_out,), jnp.float32)
        shift = bias.astype(jnp.float32)
    else:
        s = (bn_params["gamma"] /
             jnp.sqrt(bn_params["running_var"] + eps)).astype(jnp.float32)
        scale = s
        shift = (bn_params["beta"]
                 + (bias - bn_params["running_mean"]) * s).astype(jnp.float32)
    shift = shift.reshape(c_out, 1)

    # ---- Weights: (O,I,3,3) -> (O, (kh,kw,ci)) rows; fold scale into rows;
    #      zero-pad K to a multiple of 16 (bf16 sublane packing); cast bf16.
    k_rows = 9 * c_in
    k_pad = ((k_rows + 15) // 16) * 16
    w_flat = jnp.transpose(weight_oihw, (0, 2, 3, 1)).reshape(c_out, k_rows)
    w_flat = w_flat.astype(jnp.float32) * scale[:, None]
    w_flat = jnp.pad(w_flat, ((0, 0), (0, k_pad - k_rows))).astype(jnp.bfloat16)

    kernel = functools.partial(_convblock_kernel, dilation=dilation, wp=wp,
                               n_cols=n_cols, c_in=c_in, k_rows=k_rows,
                               b_tile=batch_tile)

    flops = 2 * n * c_out * k_rows * n_cols
    bytes_accessed = (n * c_in * l_ext * 2        # bf16 input
                      + c_out * k_pad * 2         # bf16 weights
                      + c_out * 4                 # shift
                      + n * c_out * n_cols * 4)   # f32 output

    out_flat = pl.pallas_call(
        kernel,
        out_shape=jax.ShapeDtypeStruct((n, c_out, n_cols), jnp.float32),
        grid_spec=pltpu.PrefetchScalarGridSpec(
            num_scalar_prefetch=0,
            grid=(grid_len,),
            in_specs=[
                pl.BlockSpec((batch_tile, c_in, l_ext), lambda i: (i, 0, 0)),
                pl.BlockSpec((c_out, k_pad), lambda i: (0, 0)),
                pl.BlockSpec((c_out, 1), lambda i: (0, 0)),
            ],
            out_specs=pl.BlockSpec((batch_tile, c_out, n_cols),
                                   lambda i: (i, 0, 0)),
            scratch_shapes=[pltpu.VMEM((k_pad, n_cols), jnp.bfloat16)],
        ),
        compiler_params=pltpu.CompilerParams(
            dimension_semantics=("parallel",)),
        cost_estimate=pl.CostEstimate(flops=flops, transcendentals=0,
                                      bytes_accessed=bytes_accessed),
    )(x_flat, w_flat, shift)

    # Free contiguous reshape, then crop the Wout valid columns of each row.
    return out_flat.reshape(n, c_out, h_out, wp)[:, :, :, :w_out]


def _reference(x_nchw, weight_oihw, bias, *, padding, dilation,
               bn_params=None, eps=1e-5):
    y = jax.lax.conv_general_dilated(
        x_nchw, weight_oihw,
        window_strides=(1, 1),
        padding=[(padding, padding), (padding, padding)],
        rhs_dilation=(dilation, dilation),
        dimension_numbers=("NCHW", "OIHW", "NCHW"),
    ) + bias[None, :, None, None]
    if bn_params is not None:
        g = bn_params["gamma"][None, :, None, None]
        b = bn_params["beta"][None, :, None, None]
        mu = bn_params["running_mean"][None, :, None, None]
        var = bn_params["running_var"][None, :, None, None]
        y = (y - mu) / jnp.sqrt(var + eps) * g + b
    return jnp.maximum(y, 0.0)


if __name__ == "__main__":
    # Convblock(in_channels=4, out_channels=8, padding_=2, dilation_=2,
    #           batch_norm=True)   -- small synthetic sizes.
    N, C_IN, H, W = 2, 4, 16, 16
    C_OUT, PAD, DIL = 8, 2, 2

    key = jax.random.PRNGKey(0)
    kx, kw, kb, kg, kbt, km, kv = jax.random.split(key, 7)

    x = jax.random.normal(kx, (N, C_IN, H, W), jnp.float32)

    # Deterministic parameter init (Conv2d: kaiming-uniform-ish scale).
    fan_in = C_IN * 3 * 3
    bound = 1.0 / np.sqrt(fan_in)
    weight = jax.random.uniform(kw, (C_OUT, C_IN, 3, 3), jnp.float32,
                                minval=-bound, maxval=bound)
    bias = jax.random.uniform(kb, (C_OUT,), jnp.float32,
                              minval=-bound, maxval=bound)

    bn_params = {
        "gamma": 1.0 + 0.1 * jax.random.normal(kg, (C_OUT,), jnp.float32),
        "beta": 0.1 * jax.random.normal(kbt, (C_OUT,), jnp.float32),
        "running_mean": 0.1 * jax.random.normal(km, (C_OUT,), jnp.float32),
        "running_var": jnp.abs(1.0 + 0.1 * jax.random.normal(kv, (C_OUT,),
                                                             jnp.float32)),
    }

    # With BatchNorm (eval-mode fold).
    out_bn = convblock_forward(x, weight, bias, padding=PAD, dilation=DIL,
                               bn_params=bn_params)
    out_bn = jax.block_until_ready(out_bn)
    ref_bn = _reference(x, weight, bias, padding=PAD, dilation=DIL,
                        bn_params=bn_params)

    # Without BatchNorm (bias + ReLU only).
    out_nobn = convblock_forward(x, weight, bias, padding=PAD, dilation=DIL)
    out_nobn = jax.block_until_ready(out_nobn)
    ref_nobn = _reference(x, weight, bias, padding=PAD, dilation=DIL)

    # bf16 MXU inputs -> loosened tolerance vs the f32 XLA reference.
    np.testing.assert_allclose(np.asarray(out_bn), np.asarray(ref_bn),
                               rtol=2e-2, atol=2e-2)
    np.testing.assert_allclose(np.asarray(out_nobn), np.asarray(ref_nobn),
                               rtol=2e-2, atol=2e-2)

    print("KERNEL_OK")
</pallas_src>

<mosaic_0001>
module attributes {stable_mosaic.version = 11 : i64} {
  func.func @_convblock_kernel(%arg0: i32, %arg1: memref<2x4x404xbf16, #tpu.memory_space<vmem>>, %arg2: memref<8x48xbf16, #tpu.memory_space<vmem>>, %arg3: memref<8x1xf32, #tpu.memory_space<vmem>>, %arg4: memref<2x8x320xf32, #tpu.memory_space<vmem>>, %arg5: memref<48x320xbf16, #tpu.memory_space<vmem>>) attributes {dimension_semantics = [#tpu.dimension_semantics<parallel>], iteration_bounds = array<i64: 1>, scalar_prefetch = 0 : i64, scratch_operands = 1 : i64, tpu.core_type = #tpu.core_type<tc>, window_params = [{transform_indices = @transform_0, window_bounds = array<i64: 2, 4, 404>}, {pipeline_mode = #tpu.pipeline_mode<synchronous>, transform_indices = @transform_1, window_bounds = array<i64: 8, 48>}, {pipeline_mode = #tpu.pipeline_mode<synchronous>, transform_indices = @transform_2, window_bounds = array<i64: 8, 1>}, {transform_indices = @transform_3, window_bounds = array<i64: 2, 8, 320>}]} {
    %c0_i32 = arith.constant 0 : i32
    %0 = arith.cmpi eq, %arg0, %c0_i32 : i32
    %1 = arith.extui %0 : i1 to i32
    %c0_i32_0 = arith.constant 0 : i32
    %2 = arith.cmpi ne, %1, %c0_i32_0 : i32
    scf.if %2 {
      %cst_91 = arith.constant 0.000000e+00 : bf16
      %77 = vector.broadcast %cst_91 : bf16 to vector<12x320xbf16>
      %c36 = arith.constant 36 : index
      %c0_92 = arith.constant 0 : index
      %78 = vector.load %arg5[%c36, %c0_92] : memref<48x320xbf16, #tpu.memory_space<vmem>>, vector<12x320xbf16>
      tpu.vector_store %arg5[%c36, %c0_92], %77 {strides = array<i32>} : memref<48x320xbf16, #tpu.memory_space<vmem>>, vector<12x320xbf16>,
    } else {
    }
    %c0 = arith.constant 0 : index
    %c0_1 = arith.constant 0 : index
    %3 = vector.load %arg2[%c0, %c0_1] : memref<8x48xbf16, #tpu.memory_space<vmem>>, vector<8x48xbf16>
    %c0_2 = arith.constant 0 : index
    %c0_3 = arith.constant 0 : index
    %4 = vector.load %arg3[%c0_2, %c0_3] : memref<8x1xf32, #tpu.memory_space<vmem>>, vector<8x1xf32>
    %c0_4 = arith.constant 0 : index
    %c0_5 = arith.constant 0 : index
    %c0_6 = arith.constant 0 : index
    %5 = vector.load %arg1[%c0_4, %c0_5, %c0_6] : memref<2x4x404xbf16, #tpu.memory_space<vmem>>, vector<1x4x320xbf16>
    %6 = vector.shape_cast %5 : vector<1x4x320xbf16> to vector<4x320xbf16>
    %c0_7 = arith.constant 0 : index
    %c0_8 = arith.constant 0 : index
    %7 = vector.load %arg5[%c0_7, %c0_8] : memref<48x320xbf16, #tpu.memory_space<vmem>>, vector<4x320xbf16>
    tpu.vector_store %arg5[%c0_7, %c0_8], %6 {strides = array<i32>} : memref<48x320xbf16, #tpu.memory_space<vmem>>, vector<4x320xbf16>,
    %c0_9 = arith.constant 0 : index
    %c0_10 = arith.constant 0 : index
    %c2 = arith.constant 2 : index
    %8 = vector.load %arg1[%c0_9, %c0_10, %c2] : memref<2x4x404xbf16, #tpu.memory_space<vmem>>, vector<1x4x320xbf16>
    %9 = vector.shape_cast %8 : vector<1x4x320xbf16> to vector<4x320xbf16>
    %c4 = arith.constant 4 : index
    %c0_11 = arith.constant 0 : index
    %10 = vector.load %arg5[%c4, %c0_11] : memref<48x320xbf16, #tpu.memory_space<vmem>>, vector<4x320xbf16>
    tpu.vector_store %arg5[%c4, %c0_11], %9 {strides = array<i32>} : memref<48x320xbf16, #tpu.memory_space<vmem>>, vector<4x320xbf16>,
    %c0_12 = arith.constant 0 : index
    %c0_13 = arith.constant 0 : index
    %c4_14 = arith.constant 4 : index
    %11 = vector.load %arg1[%c0_12, %c0_13, %c4_14] : memref<2x4x404xbf16, #tpu.memory_space<vmem>>, vector<1x4x320xbf16>
    %12 = vector.shape_cast %11 : vector<1x4x320xbf16> to vector<4x320xbf16>
    %c8 = arith.constant 8 : index
    %c0_15 = arith.constant 0 : index
    %13 = vector.load %arg5[%c8, %c0_15] : memref<48x320xbf16, #tpu.memory_space<vmem>>, vector<4x320xbf16>
    tpu.vector_store %arg5[%c8, %c0_15], %12 {strides = array<i32>} : memref<48x320xbf16, #tpu.memory_space<vmem>>, vector<4x320xbf16>,
    %c0_16 = arith.constant 0 : index
    %c0_17 = arith.constant 0 : index
    %c40 = arith.constant 40 : index
    %14 = vector.load %arg1[%c0_16, %c0_17, %c40] : memref<2x4x404xbf16, #tpu.memory_space<vmem>>, vector<1x4x320xbf16>
    %15 = vector.shape_cast %14 : vector<1x4x320xbf16> to vector<4x320xbf16>
    %c12 = arith.constant 12 : index
    %c0_18 = arith.constant 0 : index
    %16 = vector.load %arg5[%c12, %c0_18] : memref<48x320xbf16, #tpu.memory_space<vmem>>, vector<4x320xbf16>
    tpu.vector_store %arg5[%c12, %c0_18], %15 {strides = array<i32>} : memref<48x320xbf16, #tpu.memory_space<vmem>>, vector<4x320xbf16>,
    %c0_19 = arith.constant 0 : index
    %c0_20 = arith.constant 0 : index
    %c42 = arith.constant 42 : index
    %17 = vector.load %arg1[%c0_19, %c0_20, %c42] : memref<2x4x404xbf16, #tpu.memory_space<vmem>>, vector<1x4x320xbf16>
    %18 = vector.shape_cast %17 : vector<1x4x320xbf16> to vector<4x320xbf16>
    %c16 = arith.constant 16 : index
    %c0_21 = arith.constant 0 : index
    %19 = vector.load %arg5[%c16, %c0_21] : memref<48x320xbf16, #tpu.memory_space<vmem>>, vector<4x320xbf16>
    tpu.vector_store %arg5[%c16, %c0_21], %18 {strides = array<i32>} : memref<48x320xbf16, #tpu.memory_space<vmem>>, vector<4x320xbf16>,
    %c0_22 = arith.constant 0 : index
    %c0_23 = arith.constant 0 : index
    %c44 = arith.constant 44 : index
    %20 = vector.load %arg1[%c0_22, %c0_23, %c44] : memref<2x4x404xbf16, #tpu.memory_space<vmem>>, vector<1x4x320xbf16>
    %21 = vector.shape_cast %20 : vector<1x4x320xbf16> to vector<4x320xbf16>
    %c20 = arith.constant 20 : index
    %c0_24 = arith.constant 0 : index
    %22 = vector.load %arg5[%c20, %c0_24] : memref<48x320xbf16, #tpu.memory_space<vmem>>, vector<4x320xbf16>
    tpu.vector_store %arg5[%c20, %c0_24], %21 {strides = array<i32>} : memref<48x320xbf16, #tpu.memory_space<vmem>>, vector<4x320xbf16>,
    %c0_25 = arith.constant 0 : index
    %c0_26 = arith.constant 0 : index
    %c80 = arith.constant 80 : index
    %23 = vector.load %arg1[%c0_25, %c0_26, %c80] : memref<2x4x404xbf16, #tpu.memory_space<vmem>>, vector<1x4x320xbf16>
    %24 = vector.shape_cast %23 : vector<1x4x320xbf16> to vector<4x320xbf16>
    %c24 = arith.constant 24 : index
    %c0_27 = arith.constant 0 : index
    %25 = vector.load %arg5[%c24, %c0_27] : memref<48x320xbf16, #tpu.memory_space<vmem>>, vector<4x320xbf16>
    tpu.vector_store %arg5[%c24, %c0_27], %24 {strides = array<i32>} : memref<48x320xbf16, #tpu.memory_space<vmem>>, vector<4x320xbf16>,
    %c0_28 = arith.constant 0 : index
    %c0_29 = arith.constant 0 : index
    %c82 = arith.constant 82 : index
    %26 = vector.load %arg1[%c0_28, %c0_29, %c82] : memref<2x4x404xbf16, #tpu.memory_space<vmem>>, vector<1x4x320xbf16>
    %27 = vector.shape_cast %26 : vector<1x4x320xbf16> to vector<4x320xbf16>
    %c28 = arith.constant 28 : index
    %c0_30 = arith.constant 0 : index
    %28 = vector.load %arg5[%c28, %c0_30] : memref<48x320xbf16, #tpu.memory_space<vmem>>, vector<4x320xbf16>
    tpu.vector_store %arg5[%c28, %c0_30], %27 {strides = array<i32>} : memref<48x320xbf16, #tpu.memory_space<vmem>>, vector<4x320xbf16>,
    %c0_31 = arith.constant 0 : index
    %c0_32 = arith.constant 0 : index
    %c84 = arith.constant 84 : index
    %29 = vector.load %arg1[%c0_31, %c0_32, %c84] : memref<2x4x404xbf16, #tpu.memory_space<vmem>>, vector<1x4x320xbf16>
    %30 = vector.shape_cast %29 : vector<1x4x320xbf16> to vector<4x320xbf16>
    %c32 = arith.constant 32 : index
    %c0_33 = arith.constant 0 : index
    %31 = vector.load %arg5[%c32, %c0_33] : memref<48x320xbf16, #tpu.memory_space<vmem>>, vector<4x320xbf16>
    tpu.vector_store %arg5[%c32, %c0_33], %30 {strides = array<i32>} : memref<48x320xbf16, #tpu.memory_space<vmem>>, vector<4x320xbf16>,
    %c0_34 = arith.constant 0 : index
    %c0_35 = arith.constant 0 : index
    %32 = vector.load %arg5[%c0_34, %c0_35] : memref<48x320xbf16, #tpu.memory_space<vmem>>, vector<48x320xbf16>
    %cst = arith.constant dense<0.000000e+00> : vector<8x320xf32>
    %33 = tpu.matmul %3, %32, %cst {dimension_numbers = #tpu.dot_dimension_numbers<[1], [0], [0], [1], [0, 0, 1, 1], [], []>} : vector<8x48xbf16>, vector<48x320xbf16>, vector<8x320xf32> -> vector<8x320xf32>
    %34 = vector.broadcast %4 : vector<8x1xf32> to vector<8x320xf32>
    %35 = arith.addf %33, %34 : vector<8x320xf32>
    %cst_36 = arith.constant 0.000000e+00 : f32
    %36 = vector.broadcast %cst_36 : f32 to vector<8x320xf32>
    %37 = arith.maximumf %35, %36 : vector<8x320xf32>
    %c0_37 = arith.constant 0 : index
    %c0_38 = arith.constant 0 : index
    %c0_39 = arith.constant 0 : index
    %38 = vector.load %arg4[%c0_37, %c0_38, %c0_39] : memref<2x8x320xf32, #tpu.memory_space<vmem>>, vector<1x8x320xf32>
    %39 = vector.shape_cast %38 : vector<1x8x320xf32> to vector<8x320xf32>
    %40 = vector.shape_cast %37 : vector<8x320xf32> to vector<1x8x320xf32>
    tpu.vector_store %arg4[%c0_37, %c0_38, %c0_39], %40 {strides = array<i32>} : memref<2x8x320xf32, #tpu.memory_space<vmem>>, vector<1x8x320xf32>,
    %c1 = arith.constant 1 : index
    %c0_40 = arith.constant 0 : index
    %c0_41 = arith.constant 0 : index
    %41 = vector.load %arg1[%c1, %c0_40, %c0_41] : memref<2x4x404xbf16, #tpu.memory_space<vmem>>, vector<1x4x320xbf16>
    %42 = vector.shape_cast %41 : vector<1x4x320xbf16> to vector<4x320xbf16>
    %c0_42 = arith.constant 0 : index
    %c0_43 = arith.constant 0 : index
    %43 = vector.load %arg5[%c0_42, %c0_43] : memref<48x320xbf16, #tpu.memory_space<vmem>>, vector<4x320xbf16>
    tpu.vector_store %arg5[%c0_42, %c0_43], %42 {strides = array<i32>} : memref<48x320xbf16, #tpu.memory_space<vmem>>, vector<4x320xbf16>,
    %c1_44 = arith.constant 1 : index
    %c0_45 = arith.constant 0 : index
    %c2_46 = arith.constant 2 : index
    %44 = vector.load %arg1[%c1_44, %c0_45, %c2_46] : memref<2x4x404xbf16, #tpu.memory_space<vmem>>, vector<1x4x320xbf16>
    %45 = vector.shape_cast %44 : vector<1x4x320xbf16> to vector<4x320xbf16>
    %c4_47 = arith.constant 4 : index
    %c0_48 = arith.constant 0 : index
    %46 = vector.load %arg5[%c4_47, %c0_48] : memref<48x320xbf16, #tpu.memory_space<vmem>>, vector<4x320xbf16>
    tpu.vector_store %arg5[%c4_47, %c0_48], %45 {strides = array<i32>} : memref<48x320xbf16, #tpu.memory_space<vmem>>, vector<4x320xbf16>,
    %c1_49 = arith.constant 1 : index
    %c0_50 = arith.constant 0 : index
    %c4_51 = arith.constant 4 : index
    %47 = vector.load %arg1[%c1_49, %c0_50, %c4_51] : memref<2x4x404xbf16, #tpu.memory_space<vmem>>, vector<1x4x320xbf16>
    %48 = vector.shape_cast %47 : vector<1x4x320xbf16> to vector<4x320xbf16>
    %c8_52 = arith.constant 8 : index
    %c0_53 = arith.constant 0 : index
    %49 = vector.load %arg5[%c8_52, %c0_53] : memref<48x320xbf16, #tpu.memory_space<vmem>>, vector<4x320xbf16>
    tpu.vector_store %arg5[%c8_52, %c0_53], %48 {strides = array<i32>} : memref<48x320xbf16, #tpu.memory_space<vmem>>, vector<4x320xbf16>,
    %c1_54 = arith.constant 1 : index
    %c0_55 = arith.constant 0 : index
    %c40_56 = arith.constant 40 : index
    %50 = vector.load %arg1[%c1_54, %c0_55, %c40_56] : memref<2x4x404xbf16, #tpu.memory_space<vmem>>, vector<1x4x320xbf16>
    %51 = vector.shape_cast %50 : vector<1x4x320xbf16> to vector<4x320xbf16>
    %c12_57 = arith.constant 12 : index
    %c0_58 = arith.constant 0 : index
    %52 = vector.load %arg5[%c12_57, %c0_58] : memref<48x320xbf16, #tpu.memory_space<vmem>>, vector<4x320xbf16>
    tpu.vector_store %arg5[%c12_57, %c0_58], %51 {strides = array<i32>} : memref<48x320xbf16, #tpu.memory_space<vmem>>, vector<4x320xbf16>,
    %c1_59 = arith.constant 1 : index
    %c0_60 = arith.constant 0 : index
    %c42_61 = arith.constant 42 : index
    %53 = vector.load %arg1[%c1_59, %c0_60, %c42_61] : memref<2x4x404xbf16, #tpu.memory_space<vmem>>, vector<1x4x320xbf16>
    %54 = vector.shape_cast %53 : vector<1x4x320xbf16> to vector<4x320xbf16>
    %c16_62 = arith.constant 16 : index
    %c0_63 = arith.constant 0 : index
    %55 = vector.load %arg5[%c16_62, %c0_63] : memref<48x320xbf16, #tpu.memory_space<vmem>>, vector<4x320xbf16>
    tpu.vector_store %arg5[%c16_62, %c0_63], %54 {strides = array<i32>} : memref<48x320xbf16, #tpu.memory_space<vmem>>, vector<4x320xbf16>,
    %c1_64 = arith.constant 1 : index
    %c0_65 = arith.constant 0 : index
    %c44_66 = arith.constant 44 : index
    %56 = vector.load %arg1[%c1_64, %c0_65, %c44_66] : memref<2x4x404xbf16, #tpu.memory_space<vmem>>, vector<1x4x320xbf16>
    %57 = vector.shape_cast %56 : vector<1x4x320xbf16> to vector<4x320xbf16>
    %c20_67 = arith.constant 20 : index
    %c0_68 = arith.constant 0 : index
    %58 = vector.load %arg5[%c20_67, %c0_68] : memref<48x320xbf16, #tpu.memory_space<vmem>>, vector<4x320xbf16>
    tpu.vector_store %arg5[%c20_67, %c0_68], %57 {strides = array<i32>} : memref<48x320xbf16, #tpu.memory_space<vmem>>, vector<4x320xbf16>,
    %c1_69 = arith.constant 1 : index
    %c0_70 = arith.constant 0 : index
    %c80_71 = arith.constant 80 : index
    %59 = vector.load %arg1[%c1_69, %c0_70, %c80_71] : memref<2x4x404xbf16, #tpu.memory_space<vmem>>, vector<1x4x320xbf16>
    %60 = vector.shape_cast %59 : vector<1x4x320xbf16> to vector<4x320xbf16>
    %c24_72 = arith.constant 24 : index
    %c0_73 = arith.constant 0 : index
    %61 = vector.load %arg5[%c24_72, %c0_73] : memref<48x320xbf16, #tpu.memory_space<vmem>>, vector<4x320xbf16>
    tpu.vector_store %arg5[%c24_72, %c0_73], %60 {strides = array<i32>} : memref<48x320xbf16, #tpu.memory_space<vmem>>, vector<4x320xbf16>,
    %c1_74 = arith.constant 1 : index
    %c0_75 = arith.constant 0 : index
    %c82_76 = arith.constant 82 : index
    %62 = vector.load %arg1[%c1_74, %c0_75, %c82_76] : memref<2x4x404xbf16, #tpu.memory_space<vmem>>, vector<1x4x320xbf16>
    %63 = vector.shape_cast %62 : vector<1x4x320xbf16> to vector<4x320xbf16>
    %c28_77 = arith.constant 28 : index
    %c0_78 = arith.constant 0 : index
    %64 = vector.load %arg5[%c28_77, %c0_78] : memref<48x320xbf16, #tpu.memory_space<vmem>>, vector<4x320xbf16>
    tpu.vector_store %arg5[%c28_77, %c0_78], %63 {strides = array<i32>} : memref<48x320xbf16, #tpu.memory_space<vmem>>, vector<4x320xbf16>,
    %c1_79 = arith.constant 1 : index
    %c0_80 = arith.constant 0 : index
    %c84_81 = arith.constant 84 : index
    %65 = vector.load %arg1[%c1_79, %c0_80, %c84_81] : memref<2x4x404xbf16, #tpu.memory_space<vmem>>, vector<1x4x320xbf16>
    %66 = vector.shape_cast %65 : vector<1x4x320xbf16> to vector<4x320xbf16>
    %c32_82 = arith.constant 32 : index
    %c0_83 = arith.constant 0 : index
    %67 = vector.load %arg5[%c32_82, %c0_83] : memref<48x320xbf16, #tpu.memory_space<vmem>>, vector<4x320xbf16>
    tpu.vector_store %arg5[%c32_82, %c0_83], %66 {strides = array<i32>} : memref<48x320xbf16, #tpu.memory_space<vmem>>, vector<4x320xbf16>,
    %c0_84 = arith.constant 0 : index
    %c0_85 = arith.constant 0 : index
    %68 = vector.load %arg5[%c0_84, %c0_85] : memref<48x320xbf16, #tpu.memory_space<vmem>>, vector<48x320xbf16>
    %cst_86 = arith.constant dense<0.000000e+00> : vector<8x320xf32>
    %69 = tpu.matmul %3, %68, %cst_86 {dimension_numbers = #tpu.dot_dimension_numbers<[1], [0], [0], [1], [0, 0, 1, 1], [], []>} : vector<8x48xbf16>, vector<48x320xbf16>, vector<8x320xf32> -> vector<8x320xf32>
    %70 = vector.broadcast %4 : vector<8x1xf32> to vector<8x320xf32>
    %71 = arith.addf %69, %70 : vector<8x320xf32>
    %cst_87 = arith.constant 0.000000e+00 : f32
    %72 = vector.broadcast %cst_87 : f32 to vector<8x320xf32>
    %73 = arith.maximumf %71, %72 : vector<8x320xf32>
    %c1_88 = arith.constant 1 : index
    %c0_89 = arith.constant 0 : index
    %c0_90 = arith.constant 0 : index
    %74 = vector.load %arg4[%c1_88, %c0_89, %c0_90] : memref<2x8x320xf32, #tpu.memory_space<vmem>>, vector<1x8x320xf32>
    %75 = vector.shape_cast %74 : vector<1x8x320xf32> to vector<8x320xf32>
    %76 = vector.shape_cast %73 : vector<8x320xf32> to vector<1x8x320xf32>
    tpu.vector_store %arg4[%c1_88, %c0_89, %c0_90], %76 {strides = array<i32>} : memref<2x8x320xf32, #tpu.memory_space<vmem>>, vector<1x8x320xf32>,
    return
  }
  func.func @transform_0(%arg0: i32) -> (i32, i32, i32) {
    %c0_i32 = arith.constant 0 : i32
    %c0_i32_0 = arith.constant 0 : i32
    %c0_i32_1 = arith.constant 0 : i32
    return %arg0, %c0_i32, %c0_i32_0 : i32, i32, i32
  }
  func.func @transform_1(%arg0: i32) -> (i32, i32) {
    %c0_i32 = arith.constant 0 : i32
    %c0_i32_0 = arith.constant 0 : i32
    %c0_i32_1 = arith.constant 0 : i32
    return %c0_i32, %c0_i32_0 : i32, i32
  }
  func.func @transform_2(%arg0: i32) -> (i32, i32) {
    %c0_i32 = arith.constant 0 : i32
    %c0_i32_0 = arith.constant 0 : i32
    %c0_i32_1 = arith.constant 0 : i32
    return %c0_i32, %c0_i32_0 : i32, i32
  }
  func.func @transform_3(%arg0: i32) -> (i32, i32, i32) {
    %c0_i32 = arith.constant 0 : i32
    %c0_i32_0 = arith.constant 0 : i32
    %c0_i32_1 = arith.constant 0 : i32
    return %arg0, %c0_i32, %c0_i32_0 : i32, i32, i32
  }
}

</mosaic_0001>

<llo_original>
// kernel: tpu_custom_call.1
$region0: #{tpu_custom_call.1}
  #allocation0 [shape = 'u32[]', space=smem, size = 0x4, offset = 0x4, fixed_abs, tag = 'smem constant byte address 0x4 - core index']
  #allocation1 [shape = 'u32[144,128]{1,0:T(1,128)}', space=vmem, size = 0x12000, scoped, tag = 'internal scratch']
  #allocation2 [shape = 'bf16[48,320]{1,0:T(16,128)(2,1)}', space=vmem, size = 0x9000, scoped, tag = 'scratch operand']
  %s0 = inlined_call_operand.hbm [shape: bf16[2,4,404], index: 0, kind: input, shape index: {}]
  %s1 = inlined_call_operand.vmem [shape: bf16[8,48], index: 1, kind: input, shape index: {}]
  %s2 = inlined_call_operand.vmem [shape: f32[8,1], index: 2, kind: input, shape index: {}]
  %s3 = inlined_call_operand.hbm [shape: f32[2,8,320], index: 3, kind: output, shape index: {}]
  %s4 = sld [smem:[#allocation0]]
  $region30: #{tpu_custom_call.1} parent=0
    _
  %s6 = ssub.s32 1, %s4
  %s7 = scalar_select 0, %s6, %s4
  $region1: #{tpu_custom_call.1} parent=0
    #allocation3 [shape = 'u8[8192]{0}', space=vmem, size = 0x2000, scoped, tag = 'input window, operand 0, single buffered']
    #allocation4 [shape = 's32[1]{0}', space=sflag, size = 0x4, scoped, tag = 'scoped memory for tpu_custom_call.1']
    #allocation5 [shape = 's32[1]{0}', space=sflag, size = 0x4, scoped, tag = 'scoped memory for tpu_custom_call.1']
    #allocation6 [shape = 'u8[24576]{0}', space=vmem, size = 0x6000, scoped, tag = 'output window, operand 0, single buffered']
    %8 = vsyncpa [#allocation4], 0
    %9 = vsyncpa [#allocation5], 0
    // Predicated region
    $region2: #{tpu_custom_call.1} parent=1 // pred_check
      _
    $region3: #{tpu_custom_call.1} parent=1 // pred_check_branch
      %11 = sbr.rel (0) target = $region5
    $region4: #{tpu_custom_call.1} parent=1 // pred_region
      %s13 = ssub.s32 256, 256
      %14 = vsyncadd [#allocation4], %s13
      %s15 = sshll.u32 [#allocation3], 4
      %s16 = int_to_ptr.vmem [resolvable:$true] %s15
      %21 = dma.hbm_to_vmem [thread:$0]  %s0, 256, %s16, [#allocation4], 128, 128, 8
    $region5: #{tpu_custom_call.1} parent=1 // pred_fallthru
      _
    // Predicated region
    $region6: #{tpu_custom_call.1} parent=1 // pred_check
      _
    $region7: #{tpu_custom_call.1} parent=1 // pred_check_branch
      %23 = sbr.rel (0) target = $region9
    $region8: #{tpu_custom_call.1} parent=1 // pred_region
      _
    $region9: #{tpu_custom_call.1} parent=1 // pred_fallthru
      _
    // Predicated region
    $region10: #{tpu_custom_call.1} parent=1 // pred_check
      _
    $region11: #{tpu_custom_call.1} parent=1 // pred_check_branch
      %25 = sbr.rel (0) target = $region13
    $region12: #{tpu_custom_call.1} parent=1 // pred_region
      _
    $region13: #{tpu_custom_call.1} parent=1 // pred_fallthru
      _
    // Predicated region
    $region14: #{tpu_custom_call.1} parent=1 // pred_check
      _
    $region15: #{tpu_custom_call.1} parent=1 // pred_check_branch
      %27 = sbr.rel (0) target = $region17
    $region16: #{tpu_custom_call.1} parent=1 // pred_region
      %28 = dma.done [#allocation4], 256
    $region17: #{tpu_custom_call.1} parent=1 // pred_fallthru
      _
    %p30 = scmp.eq.s32.totalorder 0, 0
    // Predicated region
    $region18: #{tpu_custom_call.1} parent=1 // pred_check
      %p31 = pneg %p30
    $region19: #{tpu_custom_call.1} parent=1 // pred_check_branch
      %33 = sbr.rel (%p31) target = $region21
    $region20: #{tpu_custom_call.1} parent=1 // pred_region
      %34 = vst [vmem:[#allocation2 + $0x30] sm:$0xfc] 0
      %35 = vst [vmem:[#allocation2 + $0x38] sm:$0xfc] 0
      %vm36 = vcmask 523266
      %37 = vst.msk [vmem:[#allocation2 + $0x40] sm:$0xfc] %vm36, 0
    $region21: #{tpu_custom_call.1} parent=1 // pred_fallthru
      _
    %v38 = vld [vmem:[%s1] sm:$0xf]
    %v39 = vld [vmem:[%s2] sm:$0xff]
    %v40 = vld [vmem:[#allocation3] sm:$0x3f]
    %v42 = vcombine.high %v40, %v40
    %v44 = vunpack.c.l.s4 1983009808
    %v45 = vunpack.c.0.s8 %v44
    %v46 = vlaneseq
    %v47 = vshrl.u32 %v46, 7
    %v48 = vsub.s32 %v45, %v47
    %v49 = vrot.slane %v40, %v48
    %v51 = vunpack.c.l.s4 1983009808
    %v52 = vunpack.c.0.s8 %v51
    %v53 = vlaneseq
    %v54 = vshrl.u32 %v53, 7
    %v55 = vsub.s32 %v52, %v54
    %v56 = vrot.slane %v42, %v55
    %v57 = vcombine.high %v49, %v49
    %61 = vst [vmem:[#allocation2] sm:$0x3] %v49
    %62 = vst [vmem:[#allocation2 + $0x8] sm:$0x3] %v57
    %vm63 = vcmask 517120
    %64 = vst.msk [vmem:[#allocation2 + $0x10] sm:$0x3] %vm63, %v56
    %v65 = vld [vmem:[#allocation3] sm:$0x3f]
    %v67 = vcombine.low %v65, %v65
    %v69 = vunpack.c.l.s4 1983009808
    %v70 = vunpack.c.0.s8 %v69
    %v71 = vlaneseq
    %v72 = vshrl.u32 %v71, 7
    %v73 = vsub.s32 %v70, %v72
    %v74 = vrot.slane %v67, %v73
    %v76 = vunpack.c.l.s4 1983009808
    %v77 = vunpack.c.0.s8 %v76
    %v78 = vlaneseq
    %v79 = vshrl.u32 %v78, 7
    %v80 = vsub.s32 %v77, %v79
    %v81 = vrot.slane %v65, %v80
    %v82 = vcombine.high %v74, %v74
    %83 = vrot.lane.b32.xlu0 %v74, 126
    %v84 = vpop.permute.xlu0 %83
    %85 = vrot.lane.b32.xlu0 %v82, 126
    %v86 = vpop.permute.xlu0 %85
    %87 = vrot.lane.b32.xlu0 %v81, 126
    %v88 = vpop.permute.xlu0 %87
    %vm89 = vcmask 1031168
    %v90 = vsel %vm89, %v84, %v86
    %v91 = vsel %vm89, %v86, %v88
    %95 = vst [vmem:[#allocation2] sm:$0xc] %v90
    %96 = vst [vmem:[#allocation2 + $0x8] sm:$0xc] %v91
    %vm97 = vcmask 519170
    %98 = vst.msk [vmem:[#allocation2 + $0x10] sm:$0xc] %vm97, %v88
    %v99 = vld [vmem:[#allocation3] sm:$0x3f]
    %v101 = vcombine.high %v99, %v99
    %v103 = vunpack.c.l.s4 1983009808
    %v104 = vunpack.c.0.s8 %v103
    %v105 = vlaneseq
    %v106 = vshrl.u32 %v105, 7
    %v107 = vsub.s32 %v104, %v106
    %v108 = vrot.slane %v99, %v107
    %v110 = vunpack.c.l.s4 1983009808
    %v111 = vunpack.c.0.s8 %v110
    %v112 = vlaneseq
    %v113 = vshrl.u32 %v112, 7
    %v114 = vsub.s32 %v111, %v113
    %v115 = vrot.slane %v101, %v114
    %v116 = vcombine.low %v108, %v108
    %v117 = vcombine.low %v115, %v115
    %118 = vrot.lane.b32.xlu0 %v116, 124
    %v119 = vpop.permute.xlu0 %118
    %120 = vrot.lane.b32.xlu0 %v108, 124
    %v121 = vpop.permute.xlu0 %120
    %122 = vrot.lane.b32.xlu0 %v117, 124
    %v123 = vpop.permute.xlu0 %122
    %vm124 = vcmask 1014784
    %v125 = vsel %vm124, %v119, %v121
    %v126 = vsel %vm124, %v121, %v123
    %130 = vst [vmem:[#allocation2] sm:$0x30] %v125
    %131 = vst [vmem:[#allocation2 + $0x8] sm:$0x30] %v126
    %vm132 = vcmask 521220
    %133 = vst.msk [vmem:[#allocation2 + $0x10] sm:$0x30] %vm132, %v123
    %v134 = vld [vmem:[#allocation3] sm:$0x3f]
    %v136 = vcombine.low %v134, %v134
    %v138 = vunpack.c.l.s4 1983009808
    %v139 = vunpack.c.0.s8 %v138
    %v140 = vlaneseq
    %v141 = vshrl.u32 %v140, 7
    %v142 = vsub.s32 %v139, %v141
    %v143 = vrot.slane %v136, %v142
    %v145 = vunpack.c.l.s4 1983009808
    %v146 = vunpack.c.0.s8 %v145
    %v147 = vlaneseq
    %v148 = vshrl.u32 %v147, 7
    %v149 = vsub.s32 %v146, %v148
    %v150 = vrot.slane %v134, %v149
    %v151 = vcombine.low %v143, %v143
    %v152 = vcombine.low %v150, %v150
    %153 = vrot.lane.b32.xlu0 %v151, 88
    %v154 = vpop.permute.xlu0 %153
    %155 = vrot.lane.b32.xlu0 %v143, 88
    %v156 = vpop.permute.xlu0 %155
    %157 = vrot.lane.b32.xlu0 %v152, 88
    %v158 = vpop.permute.xlu0 %157
    %vm159 = vcmask 719872
    %v160 = vsel %vm159, %v154, %v156
    %v161 = vsel %vm159, %v156, %v158
    %165 = vst [vmem:[#allocation2] sm:$0xc0] %v160
    %166 = vst [vmem:[#allocation2 + $0x8] sm:$0xc0] %v161
    %vm167 = vcmask 523270
    %168 = vst.msk [vmem:[#allocation2 + $0x10] sm:$0xc0] %vm167, %v158
    %v169 = vld [vmem:[#allocation3] sm:$0x3f]
    %v171 = vcombine.high %v169, %v169
    %v173 = vunpack.c.l.s4 1983009808
    %v174 = vunpack.c.0.s8 %v173
    %v175 = vlaneseq
    %v176 = vshrl.u32 %v175, 7
    %v177 = vsub.s32 %v174, %v176
    %v178 = vrot.slane %v169, %v177
    %v180 = vunpack.c.l.s4 1983009808
    %v181 = vunpack.c.0.s8 %v180
    %v182 = vlaneseq
    %v183 = vshrl.u32 %v182, 7
    %v184 = vsub.s32 %v181, %v183
    %v185 = vrot.slane %v171, %v184
    %v186 = vcombine.high %v178, %v178
    %187 = vrot.lane.b32.xlu0 %v178, 86
    %v188 = vpop.permute.xlu0 %187
    %189 = vrot.lane.b32.xlu0 %v186, 86
    %v190 = vpop.permute.xlu0 %189
    %191 = vrot.lane.b32.xlu0 %v185, 86
    %v192 = vpop.permute.xlu0 %191
    %vm193 = vcmask 703488
    %v194 = vsel %vm193, %v188, %v190
    %v195 = vsel %vm193, %v190, %v192
    %199 = vst [vmem:[#allocation2 + $0x18] sm:$0x3] %v194
    %200 = vst [vmem:[#allocation2 + $0x20] sm:$0x3] %v195
    %201 = vst.msk [vmem:[#allocation2 + $0x28] sm:$0x3] %vm63, %v192
    %v202 = vld [vmem:[#allocation3] sm:$0x3f]
    %v204 = vcombine.low %v202, %v202
    %v206 = vunpack.c.l.s4 1983009808
    %v207 = vunpack.c.0.s8 %v206
    %v208 = vlaneseq
    %v209 = vshrl.u32 %v208, 7
    %v210 = vsub.s32 %v207, %v209
    %v211 = vrot.slane %v204, %v210
    %v213 = vunpack.c.l.s4 1983009808
    %v214 = vunpack.c.0.s8 %v213
    %v215 = vlaneseq
    %v216 = vshrl.u32 %v215, 7
    %v217 = vsub.s32 %v214, %v216
    %v218 = vrot.slane %v202, %v217
    %v219 = vcombine.high %v211, %v211
    %220 = vrot.lane.b32.xlu0 %v211, 84
    %v221 = vpop.permute.xlu0 %220
    %222 = vrot.lane.b32.xlu0 %v219, 84
    %v223 = vpop.permute.xlu0 %222
    %224 = vrot.lane.b32.xlu0 %v218, 84
    %v225 = vpop.permute.xlu0 %224
    %vm226 = vcmask 687104
    %v227 = vsel %vm226, %v221, %v223
    %v228 = vsel %vm226, %v223, %v225
    %232 = vst [vmem:[#allocation2 + $0x18] sm:$0xc] %v227
    %233 = vst [vmem:[#allocation2 + $0x20] sm:$0xc] %v228
    %234 = vst.msk [vmem:[#allocation2 + $0x28] sm:$0xc] %vm97, %v225
    %v235 = vld [vmem:[#allocation3] sm:$0xff]
    %v237 = vcombine.high %v235, %v235
    %v239 = vunpack.c.l.s4 1983009808
    %v240 = vunpack.c.0.s8 %v239
    %v241 = vlaneseq
    %v242 = vshrl.u32 %v241, 7
    %v243 = vsub.s32 %v240, %v242
    %v244 = vrot.slane %v235, %v243
    %v246 = vunpack.c.l.s4 1983009808
    %v247 = vunpack.c.0.s8 %v246
    %v248 = vlaneseq
    %v249 = vshrl.u32 %v248, 7
    %v250 = vsub.s32 %v247, %v249
    %v251 = vrot.slane %v237, %v250
    %v252 = vcombine.low %v244, %v244
    %v253 = vcombine.low %v251, %v251
    %254 = vrot.lane.b32.xlu0 %v252, 48
    %v255 = vpop.permute.xlu0 %254
    %256 = vrot.lane.b32.xlu0 %v244, 48
    %v257 = vpop.permute.xlu0 %256
    %258 = vrot.lane.b32.xlu0 %v253, 48
    %v259 = vpop.permute.xlu0 %258
    %260 = vrot.lane.b32.xlu0 %v251, 48
    %v261 = vpop.permute.xlu0 %260
    %vm262 = vcmask 392192
    %v263 = vsel %vm262, %v255, %v257
    %v264 = vsel %vm262, %v257, %v259
    %v265 = vsel %vm262, %v259, %v261
    %269 = vst [vmem:[#allocation2 + $0x18] sm:$0x30] %v263
    %270 = vst [vmem:[#allocation2 + $0x20] sm:$0x30] %v264
    %271 = vst.msk [vmem:[#allocation2 + $0x28] sm:$0x30] %vm132, %v265
    %v272 = vld [vmem:[#allocation3] sm:$0xff]
    %v274 = vcombine.low %v272, %v272
    %v276 = vunpack.c.l.s4 1983009808
    %v277 = vunpack.c.0.s8 %v276
    %v278 = vlaneseq
    %v279 = vshrl.u32 %v278, 7
    %v280 = vsub.s32 %v277, %v279
    %v281 = vrot.slane %v274, %v280
    %v283 = vunpack.c.l.s4 1983009808
    %v284 = vunpack.c.0.s8 %v283
    %v285 = vlaneseq
    %v286 = vshrl.u32 %v285, 7
    %v287 = vsub.s32 %v284, %v286
    %v288 = vrot.slane %v272, %v287
    %v289 = vcombine.low %v281, %v281
    %v290 = vcombine.low %v288, %v288
    %291 = vrot.lane.b32.xlu0 %v289, 46
    %v292 = vpop.permute.xlu0 %291
    %293 = vrot.lane.b32.xlu0 %v281, 46
    %v294 = vpop.permute.xlu0 %293
    %295 = vrot.lane.b32.xlu0 %v290, 46
    %v296 = vpop.permute.xlu0 %295
    %297 = vrot.lane.b32.xlu0 %v288, 46
    %v298 = vpop.permute.xlu0 %297
    %vm299 = vcmask 375808
    %v300 = vsel %vm299, %v292, %v294
    %v301 = vsel %vm299, %v294, %v296
    %v302 = vsel %vm299, %v296, %v298
    %306 = vst [vmem:[#allocation2 + $0x18] sm:$0xc0] %v300
    %307 = vst [vmem:[#allocation2 + $0x20] sm:$0xc0] %v301
    %308 = vst.msk [vmem:[#allocation2 + $0x28] sm:$0xc0] %vm167, %v302
    %v309 = vld [vmem:[#allocation3] sm:$0xff]
    %v311 = vcombine.high %v309, %v309
    %v313 = vunpack.c.l.s4 1983009808
    %v314 = vunpack.c.0.s8 %v313
    %v315 = vlaneseq
    %v316 = vshrl.u32 %v315, 7
    %v317 = vsub.s32 %v314, %v316
    %v318 = vrot.slane %v309, %v317
    %v320 = vunpack.c.l.s4 1983009808
    %v321 = vunpack.c.0.s8 %v320
    %v322 = vlaneseq
    %v323 = vshrl.u32 %v322, 7
    %v324 = vsub.s32 %v321, %v323
    %v325 = vrot.slane %v311, %v324
    %v326 = vcombine.high %v318, %v318
    %v327 = vcombine.high %v325, %v325
    %328 = vrot.lane.b32.xlu0 %v318, 44
    %v329 = vpop.permute.xlu0 %328
    %330 = vrot.lane.b32.xlu0 %v326, 44
    %v331 = vpop.permute.xlu0 %330
    %332 = vrot.lane.b32.xlu0 %v325, 44
    %v333 = vpop.permute.xlu0 %332
    %334 = vrot.lane.b32.xlu0 %v327, 44
    %v335 = vpop.permute.xlu0 %334
    %vm336 = vcmask 359424
    %v337 = vsel %vm336, %v329, %v331
    %v338 = vsel %vm336, %v331, %v333
    %v339 = vsel %vm336, %v333, %v335
    %343 = vst [vmem:[#allocation2 + $0x30] sm:$0x3] %v337
    %344 = vst [vmem:[#allocation2 + $0x38] sm:$0x3] %v338
    %345 = vst.msk [vmem:[#allocation2 + $0x40] sm:$0x3] %vm63, %v339
    %v346 = vld [vmem:[#allocation2] sm:$0xff]
    %v347 = vld [vmem:[#allocation2 + $0x8] sm:$0xff]
    %v348 = vld [vmem:[#allocation2 + $0x10] sm:$0xff]
    %v349 = vld [vmem:[#allocation2 + $0x18] sm:$0xff]
    %v350 = vld [vmem:[#allocation2 + $0x20] sm:$0xff]
    %v351 = vld [vmem:[#allocation2 + $0x28] sm:$0xff]
    %v352 = vld [vmem:[#allocation2 + $0x30] sm:$0xff]
    %v353 = vld [vmem:[#allocation2 + $0x38] sm:$0xff]
    %v354 = vld [vmem:[#allocation2 + $0x40] sm:$0xff]
    %356 = vset.pattern.permute.xlu0 0
    %357 = vperm.xlu0 %356, %v39
    %v358 = vpop.permute.xlu0 %357
    %vm360 = vcmask 392192
    %v362 = vsel %vm360, %v38, 0
    %364 = vmatprep.subr.bf16.mxu0 %v347
    %365 = vmatpush1.bf16.msra.mxu0 %v346
    %366 = vmatprep.subr.bf16.mxu0 %v350
    %367 = vmatpush1.bf16.msra.mxu0 %v349
    %368 = vmatprep.subr.bf16.mxu0 %v353
    %369 = vmatpush1.bf16.msra.mxu0 %v352
    %370 = vmatprep.subr.bf16.mxu0 0
    %371 = vmatpush1.bf16.msra.mxu0 0
    %372 = vmatprep.subr.bf16.mxu0 0
    %373 = vmatpush1.bf16.msra.mxu0 0
    %374 = vmatprep.subr.bf16.mxu0 0
    %375 = vmatpush1.bf16.msra.mxu0 0
    %376 = vmatprep.subr.bf16.mxu0 0
    %377 = vmatpush1.bf16.msra.mxu0 0
    %378 = vmatprep.subr.bf16.mxu0 0
    %379 = vmatpush1.bf16.msra.mxu0 0
    %380 = vmatprep.subr.bf16.mxu0 0
    %381 = vmatpush1.bf16.msra.mxu0 0
    %382 = vmatprep.subr.bf16.mxu0 0
    %383 = vmatpush1.bf16.msra.mxu0 0
    %384 = vmatprep.subr.bf16.mxu0 0
    %385 = vmatpush1.bf16.msra.mxu0 0
    %386 = vmatprep.subr.bf16.mxu0 0
    %387 = vmatpush1.bf16.msra.mxu0 0
    %388 = vmatprep.subr.bf16.mxu0 0
    %389 = vmatpush1.bf16.msra.mxu0 0
    %390 = vmatprep.subr.bf16.mxu0 0
    %391 = vmatpush1.bf16.msra.mxu0 0
    %392 = vmatprep.subr.bf16.mxu0 0
    %393 = vmatpush1.bf16.msra.mxu0 0
    %394 = vmatprep.subr.bf16.mxu0 0
    %395 = vmatpush1.bf16.msra.mxu0 0
    %396 = vmatprep.mubr.bf16.mxu0 0
    %397 = vmatmul.mubr.bf16.gmra.mrb[0].mxu0 %v362
    %v398 = vpop.f32.mrb[0].mxu0
    %v399 = vadd.f32 %v358, %v398
    %v400 = vpop.f32.mrb[0].mxu0
    %v401 = vadd.f32 %v358, %v400
    %v402 = vpop.f32.mrb[0].mxu0
    %v403 = vpop.f32.mrb[0].mxu0
    %404 = vdwg.mxu0
    %405 = vmatprep.subr.bf16.mxu0 0
    %406 = vmatpush1.bf16.msra.mxu0 %v348
    %407 = vmatprep.subr.bf16.mxu0 0
    %408 = vmatpush1.bf16.msra.mxu0 %v351
    %409 = vmatprep.subr.bf16.mxu0 0
    %410 = vmatpush1.bf16.msra.mxu0 %v354
    %411 = vmatprep.subr.bf16.mxu0 0
    %412 = vmatpush1.bf16.msra.mxu0 0
    %413 = vmatprep.subr.bf16.mxu0 0
    %414 = vmatpush1.bf16.msra.mxu0 0
    %415 = vmatprep.subr.bf16.mxu0 0
    %416 = vmatpush1.bf16.msra.mxu0 0
    %417 = vmatprep.subr.bf16.mxu0 0
    %418 = vmatpush1.bf16.msra.mxu0 0
    %419 = vmatprep.subr.bf16.mxu0 0
    %420 = vmatpush1.bf16.msra.mxu0 0
    %421 = vmatprep.subr.bf16.mxu0 0
    %422 = vmatpush1.bf16.msra.mxu0 0
    %423 = vmatprep.subr.bf16.mxu0 0
    %424 = vmatpush1.bf16.msra.mxu0 0
    %425 = vmatprep.subr.bf16.mxu0 0
    %426 = vmatpush1.bf16.msra.mxu0 0
    %427 = vmatprep.subr.bf16.mxu0 0
    %428 = vmatpush1.bf16.msra.mxu0 0
    %429 = vmatprep.subr.bf16.mxu0 0
    %430 = vmatpush1.bf16.msra.mxu0 0
    %431 = vmatprep.subr.bf16.mxu0 0
    %432 = vmatpush1.bf16.msra.mxu0 0
    %433 = vmatprep.subr.bf16.mxu0 0
    %434 = vmatpush1.bf16.msra.mxu0 0
    %435 = vmatprep.subr.bf16.mxu0 0
    %436 = vmatpush1.bf16.msra.mxu0 0
    %437 = vmatprep.mubr.bf16.mxu0 0
    %438 = vmatmul.mubr.bf16.gmra.mrb[0].mxu0 %v362
    %v439 = vpop.f32.mrb[0].mxu0
    %v440 = vadd.f32 %v358, %v439
    %v441 = vpop.f32.mrb[0].mxu0
    %v442 = vpop.f32.mrb[0].mxu0
    %v443 = vpop.f32.mrb[0].mxu0
    %444 = vdwg.mxu0
    %v445 = vmax.f32 %v399, 0.0
    %v446 = vmax.f32 %v401, 0.0
    %v447 = vmax.f32 %v440, 0.0
    %448 = vst [vmem:[#allocation6] sm:$0xff] %v445
    %449 = vst [vmem:[#allocation6 + $0x8] sm:$0xff] %v446
    %vm450 = vcmask 523264
    %451 = vst.msk [vmem:[#allocation6 + $0x10] sm:$0xff] %vm450, %v447
    %s452 = scalar_lea.vmem [#allocation3], 8
    %v453 = vld [vmem:[%s452] sm:$0x3f]
    %v455 = vcombine.high %v453, %v453
    %v457 = vunpack.c.l.s4 1983009808
    %v458 = vunpack.c.0.s8 %v457
    %v459 = vlaneseq
    %v460 = vshrl.u32 %v459, 7
    %v461 = vsub.s32 %v458, %v460
    %v462 = vrot.slane %v453, %v461
    %v464 = vunpack.c.l.s4 1983009808
    %v465 = vunpack.c.0.s8 %v464
    %v466 = vlaneseq
    %v467 = vshrl.u32 %v466, 7
    %v468 = vsub.s32 %v465, %v467
    %v469 = vrot.slane %v455, %v468
    %v470 = vcombine.high %v462, %v462
    %474 = vst [vmem:[#allocation2] sm:$0x3] %v462
    %475 = vst [vmem:[#allocation2 + $0x8] sm:$0x3] %v470
    %476 = vst.msk [vmem:[#allocation2 + $0x10] sm:$0x3] %vm63, %v469
    %v477 = vld [vmem:[%s452] sm:$0x3f]
    %v479 = vcombine.low %v477, %v477
    %v481 = vunpack.c.l.s4 1983009808
    %v482 = vunpack.c.0.s8 %v481
    %v483 = vlaneseq
    %v484 = vshrl.u32 %v483, 7
    %v485 = vsub.s32 %v482, %v484
    %v486 = vrot.slane %v479, %v485
    %v488 = vunpack.c.l.s4 1983009808
    %v489 = vunpack.c.0.s8 %v488
    %v490 = vlaneseq
    %v491 = vshrl.u32 %v490, 7
    %v492 = vsub.s32 %v489, %v491
    %v493 = vrot.slane %v477, %v492
    %v494 = vcombine.high %v486, %v486
    %495 = vrot.lane.b32.xlu0 %v486, 126
    %v496 = vpop.permute.xlu0 %495
    %497 = vrot.lane.b32.xlu0 %v494, 126
    %v498 = vpop.permute.xlu0 %497
    %499 = vrot.lane.b32.xlu0 %v493, 126
    %v500 = vpop.permute.xlu0 %499
    %v501 = vsel %vm89, %v496, %v498
    %v502 = vsel %vm89, %v498, %v500
    %506 = vst [vmem:[#allocation2] sm:$0xc] %v501
    %507 = vst [vmem:[#allocation2 + $0x8] sm:$0xc] %v502
    %508 = vst.msk [vmem:[#allocation2 + $0x10] sm:$0xc] %vm97, %v500
    %v509 = vld [vmem:[%s452] sm:$0x3f]
    %v511 = vcombine.high %v509, %v509
    %v513 = vunpack.c.l.s4 1983009808
    %v514 = vunpack.c.0.s8 %v513
    %v515 = vlaneseq
    %v516 = vshrl.u32 %v515, 7
    %v517 = vsub.s32 %v514, %v516
    %v518 = vrot.slane %v509, %v517
    %v520 = vunpack.c.l.s4 1983009808
    %v521 = vunpack.c.0.s8 %v520
    %v522 = vlaneseq
    %v523 = vshrl.u32 %v522, 7
    %v524 = vsub.s32 %v521, %v523
    %v525 = vrot.slane %v511, %v524
    %v526 = vcombine.low %v518, %v518
    %v527 = vcombine.low %v525, %v525
    %528 = vrot.lane.b32.xlu0 %v526, 124
    %v529 = vpop.permute.xlu0 %528
    %530 = vrot.lane.b32.xlu0 %v518, 124
    %v531 = vpop.permute.xlu0 %530
    %532 = vrot.lane.b32.xlu0 %v527, 124
    %v533 = vpop.permute.xlu0 %532
    %v534 = vsel %vm124, %v529, %v531
    %v535 = vsel %vm124, %v531, %v533
    %539 = vst [vmem:[#allocation2] sm:$0x30] %v534
    %540 = vst [vmem:[#allocation2 + $0x8] sm:$0x30] %v535
    %541 = vst.msk [vmem:[#allocation2 + $0x10] sm:$0x30] %vm132, %v533
    %v542 = vld [vmem:[%s452] sm:$0x3f]
    %v544 = vcombine.low %v542, %v542
    %v546 = vunpack.c.l.s4 1983009808
    %v547 = vunpack.c.0.s8 %v546
    %v548 = vlaneseq
    %v549 = vshrl.u32 %v548, 7
    %v550 = vsub.s32 %v547, %v549
    %v551 = vrot.slane %v544, %v550
    %v553 = vunpack.c.l.s4 1983009808
    %v554 = vunpack.c.0.s8 %v553
    %v555 = vlaneseq
    %v556 = vshrl.u32 %v555, 7
    %v557 = vsub.s32 %v554, %v556
    %v558 = vrot.slane %v542, %v557
    %v559 = vcombine.low %v551, %v551
    %v560 = vcombine.low %v558, %v558
    %561 = vrot.lane.b32.xlu0 %v559, 88
    %v562 = vpop.permute.xlu0 %561
    %563 = vrot.lane.b32.xlu0 %v551, 88
    %v564 = vpop.permute.xlu0 %563
    %565 = vrot.lane.b32.xlu0 %v560, 88
    %v566 = vpop.permute.xlu0 %565
    %v567 = vsel %vm159, %v562, %v564
    %v568 = vsel %vm159, %v564, %v566
    %572 = vst [vmem:[#allocation2] sm:$0xc0] %v567
    %573 = vst [vmem:[#allocation2 + $0x8] sm:$0xc0] %v568
    %574 = vst.msk [vmem:[#allocation2 + $0x10] sm:$0xc0] %vm167, %v566
    %v575 = vld [vmem:[%s452] sm:$0x3f]
    %v577 = vcombine.high %v575, %v575
    %v579 = vunpack.c.l.s4 1983009808
    %v580 = vunpack.c.0.s8 %v579
    %v581 = vlaneseq
    %v582 = vshrl.u32 %v581, 7
    %v583 = vsub.s32 %v580, %v582
    %v584 = vrot.slane %v575, %v583
    %v586 = vunpack.c.l.s4 1983009808
    %v587 = vunpack.c.0.s8 %v586
    %v588 = vlaneseq
    %v589 = vshrl.u32 %v588, 7
    %v590 = vsub.s32 %v587, %v589
    %v591 = vrot.slane %v577, %v590
    %v592 = vcombine.high %v584, %v584
    %593 = vrot.lane.b32.xlu0 %v584, 86
    %v594 = vpop.permute.xlu0 %593
    %595 = vrot.lane.b32.xlu0 %v592, 86
    %v596 = vpop.permute.xlu0 %595
    %597 = vrot.lane.b32.xlu0 %v591, 86
    %v598 = vpop.permute.xlu0 %597
    %v599 = vsel %vm193, %v594, %v596
    %v600 = vsel %vm193, %v596, %v598
    %604 = vst [vmem:[#allocation2 + $0x18] sm:$0x3] %v599
    %605 = vst [vmem:[#allocation2 + $0x20] sm:$0x3] %v600
    %606 = vst.msk [vmem:[#allocation2 + $0x28] sm:$0x3] %vm63, %v598
    %v607 = vld [vmem:[%s452] sm:$0x3f]
    %v609 = vcombine.low %v607, %v607
    %v611 = vunpack.c.l.s4 1983009808
    %v612 = vunpack.c.0.s8 %v611
    %v613 = vlaneseq
    %v614 = vshrl.u32 %v613, 7
    %v615 = vsub.s32 %v612, %v614
    %v616 = vrot.slane %v609, %v615
    %v618 = vunpack.c.l.s4 1983009808
    %v619 = vunpack.c.0.s8 %v618
    %v620 = vlaneseq
    %v621 = vshrl.u32 %v620, 7
    %v622 = vsub.s32 %v619, %v621
    %v623 = vrot.slane %v607, %v622
    %v624 = vcombine.high %v616, %v616
    %625 = vrot.lane.b32.xlu0 %v616, 84
    %v626 = vpop.permute.xlu0 %625
    %627 = vrot.lane.b32.xlu0 %v624, 84
    %v628 = vpop.permute.xlu0 %627
    %629 = vrot.lane.b32.xlu0 %v623, 84
    %v630 = vpop.permute.xlu0 %629
    %v631 = vsel %vm226, %v626, %v628
    %v632 = vsel %vm226, %v628, %v630
    %636 = vst [vmem:[#allocation2 + $0x18] sm:$0xc] %v631
    %637 = vst [vmem:[#allocation2 + $0x20] sm:$0xc] %v632
    %638 = vst.msk [vmem:[#allocation2 + $0x28] sm:$0xc] %vm97, %v630
    %v639 = vld [vmem:[%s452] sm:$0xff]
    %v641 = vcombine.high %v639, %v639
    %v643 = vunpack.c.l.s4 1983009808
    %v644 = vunpack.c.0.s8 %v643
    %v645 = vlaneseq
    %v646 = vshrl.u32 %v645, 7
    %v647 = vsub.s32 %v644, %v646
    %v648 = vrot.slane %v639, %v647
    %v650 = vunpack.c.l.s4 1983009808
    %v651 = vunpack.c.0.s8 %v650
    %v652 = vlaneseq
    %v653 = vshrl.u32 %v652, 7
    %v654 = vsub.s32 %v651, %v653
    %v655 = vrot.slane %v641, %v654
    %v656 = vcombine.low %v648, %v648
    %v657 = vcombine.low %v655, %v655
    %658 = vrot.lane.b32.xlu0 %v656, 48
    %v659 = vpop.permute.xlu0 %658
    %660 = vrot.lane.b32.xlu0 %v648, 48
    %v661 = vpop.permute.xlu0 %660
    %662 = vrot.lane.b32.xlu0 %v657, 48
    %v663 = vpop.permute.xlu0 %662
    %664 = vrot.lane.b32.xlu0 %v655, 48
    %v665 = vpop.permute.xlu0 %664
    %v666 = vsel %vm262, %v659, %v661
    %v667 = vsel %vm262, %v661, %v663
    %v668 = vsel %vm262, %v663, %v665
    %672 = vst [vmem:[#allocation2 + $0x18] sm:$0x30] %v666
    %673 = vst [vmem:[#allocation2 + $0x20] sm:$0x30] %v667
    %674 = vst.msk [vmem:[#allocation2 + $0x28] sm:$0x30] %vm132, %v668
    %v675 = vld [vmem:[%s452] sm:$0xff]
    %v677 = vcombine.low %v675, %v675
    %v679 = vunpack.c.l.s4 1983009808
    %v680 = vunpack.c.0.s8 %v679
    %v681 = vlaneseq
    %v682 = vshrl.u32 %v681, 7
    %v683 = vsub.s32 %v680, %v682
    %v684 = vrot.slane %v677, %v683
    %v686 = vunpack.c.l.s4 1983009808
    %v687 = vunpack.c.0.s8 %v686
    %v688 = vlaneseq
    %v689 = vshrl.u32 %v688, 7
    %v690 = vsub.s32 %v687, %v689
    %v691 = vrot.slane %v675, %v690
    %v692 = vcombine.low %v684, %v684
    %v693 = vcombine.low %v691, %v691
    %694 = vrot.lane.b32.xlu0 %v692, 46
    %v695 = vpop.permute.xlu0 %694
    %696 = vrot.lane.b32.xlu0 %v684, 46
    %v697 = vpop.permute.xlu0 %696
    %698 = vrot.lane.b32.xlu0 %v693, 46
    %v699 = vpop.permute.xlu0 %698
    %700 = vrot.lane.b32.xlu0 %v691, 46
    %v701 = vpop.permute.xlu0 %700
    %v702 = vsel %vm299, %v695, %v697
    %v703 = vsel %vm299, %v697, %v699
    %v704 = vsel %vm299, %v699, %v701
    %708 = vst [vmem:[#allocation2 + $0x18] sm:$0xc0] %v702
    %709 = vst [vmem:[#allocation2 + $0x20] sm:$0xc0] %v703
    %710 = vst.msk [vmem:[#allocation2 + $0x28] sm:$0xc0] %vm167, %v704
    %v711 = vld [vmem:[%s452] sm:$0xff]
    %v713 = vcombine.high %v711, %v711
    %v715 = vunpack.c.l.s4 1983009808
    %v716 = vunpack.c.0.s8 %v715
    %v717 = vlaneseq
    %v718 = vshrl.u32 %v717, 7
    %v719 = vsub.s32 %v716, %v718
    %v720 = vrot.slane %v711, %v719
    %v722 = vunpack.c.l.s4 1983009808
    %v723 = vunpack.c.0.s8 %v722
    %v724 = vlaneseq
    %v725 = vshrl.u32 %v724, 7
    %v726 = vsub.s32 %v723, %v725
    %v727 = vrot.slane %v713, %v726
    %v728 = vcombine.high %v720, %v720
    %v729 = vcombine.high %v727, %v727
    %730 = vrot.lane.b32.xlu0 %v720, 44
    %v731 = vpop.permute.xlu0 %730
    %732 = vrot.lane.b32.xlu0 %v728, 44
    %v733 = vpop.permute.xlu0 %732
    %734 = vrot.lane.b32.xlu0 %v727, 44
    %v735 = vpop.permute.xlu0 %734
    %736 = vrot.lane.b32.xlu0 %v729, 44
    %v737 = vpop.permute.xlu0 %736
    %v738 = vsel %vm336, %v731, %v733
    %v739 = vsel %vm336, %v733, %v735
    %v740 = vsel %vm336, %v735, %v737
    %744 = vst [vmem:[#allocation2 + $0x30] sm:$0x3] %v738
    %745 = vst [vmem:[#allocation2 + $0x38] sm:$0x3] %v739
    %746 = vst.msk [vmem:[#allocation2 + $0x40] sm:$0x3] %vm63, %v740
    %v747 = vld [vmem:[#allocation2] sm:$0xff]
    %v748 = vld [vmem:[#allocation2 + $0x8] sm:$0xff]
    %v749 = vld [vmem:[#allocation2 + $0x10] sm:$0xff]
    %v750 = vld [vmem:[#allocation2 + $0x18] sm:$0xff]
    %v751 = vld [vmem:[#allocation2 + $0x20] sm:$0xff]
    %v752 = vld [vmem:[#allocation2 + $0x28] sm:$0xff]
    %v753 = vld [vmem:[#allocation2 + $0x30] sm:$0xff]
    %v754 = vld [vmem:[#allocation2 + $0x38] sm:$0xff]
    %v755 = vld [vmem:[#allocation2 + $0x40] sm:$0xff]
    %756 = vmatprep.subr.bf16.mxu0 %v748
    %757 = vmatpush1.bf16.msra.mxu0 %v747
    %758 = vmatprep.subr.bf16.mxu0 %v751
    %759 = vmatpush1.bf16.msra.mxu0 %v750
    %760 = vmatprep.subr.bf16.mxu0 %v754
    %761 = vmatpush1.bf16.msra.mxu0 %v753
    %762 = vmatprep.subr.bf16.mxu0 0
    %763 = vmatpush1.bf16.msra.mxu0 0
    %764 = vmatprep.subr.bf16.mxu0 0
    %765 = vmatpush1.bf16.msra.mxu0 0
    %766 = vmatprep.subr.bf16.mxu0 0
    %767 = vmatpush1.bf16.msra.mxu0 0
    %768 = vmatprep.subr.bf16.mxu0 0
    %769 = vmatpush1.bf16.msra.mxu0 0
    %770 = vmatprep.subr.bf16.mxu0 0
    %771 = vmatpush1.bf16.msra.mxu0 0
    %772 = vmatprep.subr.bf16.mxu0 0
    %773 = vmatpush1.bf16.msra.mxu0 0
    %774 = vmatprep.subr.bf16.mxu0 0
    %775 = vmatpush1.bf16.msra.mxu0 0
    %776 = vmatprep.subr.bf16.mxu0 0
    %777 = vmatpush1.bf16.msra.mxu0 0
    %778 = vmatprep.subr.bf16.mxu0 0
    %779 = vmatpush1.bf16.msra.mxu0 0
    %780 = vmatprep.subr.bf16.mxu0 0
    %781 = vmatpush1.bf16.msra.mxu0 0
    %782 = vmatprep.subr.bf16.mxu0 0
    %783 = vmatpush1.bf16.msra.mxu0 0
    %784 = vmatprep.subr.bf16.mxu0 0
    %785 = vmatpush1.bf16.msra.mxu0 0
    %786 = vmatprep.subr.bf16.mxu0 0
    %787 = vmatpush1.bf16.msra.mxu0 0
    %788 = vmatprep.mubr.bf16.mxu0 0
    %789 = vmatmul.mubr.bf16.gmra.mrb[0].mxu0 %v362
    %v790 = vpop.f32.mrb[0].mxu0
    %v791 = vadd.f32 %v358, %v790
    %v792 = vpop.f32.mrb[0].mxu0
    %v793 = vadd.f32 %v358, %v792
    %v794 = vpop.f32.mrb[0].mxu0
    %v795 = vpop.f32.mrb[0].mxu0
    %796 = vdwg.mxu0
    %797 = vmatprep.subr.bf16.mxu0 0
    %798 = vmatpush1.bf16.msra.mxu0 %v749
    %799 = vmatprep.subr.bf16.mxu0 0
    %800 = vmatpush1.bf16.msra.mxu0 %v752
    %801 = vmatprep.subr.bf16.mxu0 0
    %802 = vmatpush1.bf16.msra.mxu0 %v755
    %803 = vmatprep.subr.bf16.mxu0 0
    %804 = vmatpush1.bf16.msra.mxu0 0
    %805 = vmatprep.subr.bf16.mxu0 0
    %806 = vmatpush1.bf16.msra.mxu0 0
    %807 = vmatprep.subr.bf16.mxu0 0
    %808 = vmatpush1.bf16.msra.mxu0 0
    %809 = vmatprep.subr.bf16.mxu0 0
    %810 = vmatpush1.bf16.msra.mxu0 0
    %811 = vmatprep.subr.bf16.mxu0 0
    %812 = vmatpush1.bf16.msra.mxu0 0
    %813 = vmatprep.subr.bf16.mxu0 0
    %814 = vmatpush1.bf16.msra.mxu0 0
    %815 = vmatprep.subr.bf16.mxu0 0
    %816 = vmatpush1.bf16.msra.mxu0 0
    %817 = vmatprep.subr.bf16.mxu0 0
    %818 = vmatpush1.bf16.msra.mxu0 0
    %819 = vmatprep.subr.bf16.mxu0 0
    %820 = vmatpush1.bf16.msra.mxu0 0
    %821 = vmatprep.subr.bf16.mxu0 0
    %822 = vmatpush1.bf16.msra.mxu0 0
    %823 = vmatprep.subr.bf16.mxu0 0
    %824 = vmatpush1.bf16.msra.mxu0 0
    %825 = vmatprep.subr.bf16.mxu0 0
    %826 = vmatpush1.bf16.msra.mxu0 0
    %827 = vmatprep.subr.bf16.mxu0 0
    %828 = vmatpush1.bf16.msra.mxu0 0
    %829 = vmatprep.mubr.bf16.mxu0 0
    %830 = vmatmul.mubr.bf16.gmra.mrb[0].mxu0 %v362
    %v831 = vpop.f32.mrb[0].mxu0
    %v832 = vadd.f32 %v358, %v831
    %v833 = vpop.f32.mrb[0].mxu0
    %v834 = vpop.f32.mrb[0].mxu0
    %v835 = vpop.f32.mrb[0].mxu0
    %836 = vdwg.mxu0
    %v837 = vmax.f32 %v791, 0.0
    %v838 = vmax.f32 %v793, 0.0
    %v839 = vmax.f32 %v832, 0.0
    %s840 = scalar_lea.vmem [#allocation6], 24
    %841 = vst [vmem:[%s840] sm:$0xff] %v837
    %842 = vst [vmem:[%s840 + $0x8] sm:$0xff] %v838
    %843 = vst.msk [vmem:[%s840 + $0x10] sm:$0xff] %vm450, %v839
    // Predicated region
    $region22: #{tpu_custom_call.1} parent=1 // pred_check
      _
    $region23: #{tpu_custom_call.1} parent=1 // pred_check_branch
      %845 = sbr.rel (0) target = $region25
    $region24: #{tpu_custom_call.1} parent=1 // pred_region
      %s847 = ssub.s32 768, 768
      %848 = vsyncadd [#allocation5], %s847
      %s849 = sshll.u32 [#allocation6], 4
      %s850 = int_to_ptr.vmem [resolvable:$true] %s849
      %855 = dma.vmem_to_hbm [thread:$0]  %s850, 768, %s3, [#allocation5], 384, 384, 24
    $region25: #{tpu_custom_call.1} parent=1 // pred_fallthru
      _
    // Predicated region
    $region26: #{tpu_custom_call.1} parent=1 // pred_check
      _
    $region27: #{tpu_custom_call.1} parent=1 // pred_check_branch
      %857 = sbr.rel (0) target = $region29
    $region28: #{tpu_custom_call.1} parent=1 // pred_region
      %858 = dma.done [#allocation5], 768
    $region29: #{tpu_custom_call.1} parent=1 // pred_fallthru
      _
    %859 = vsyncpa [#allocation4], 1
    %860 = vsyncpa [#allocation5], 1

</llo_original>
